<compile_context>
chip_gen: v5e
topology: v5e:2x2
jax: 0.10.0
libtpu: 0.0.40
codegen_flags: <defaults>
</compile_context>

<pallas_src>
import jax
import jax.numpy as jnp
from jax.experimental import pallas as pl
from jax.experimental.pallas import tpu as pltpu


def _round_up(x: int, m: int) -> int:
    return ((x + m - 1) // m) * m


def _choose_tile_b(batch: int, max_tile_b: int) -> int:
    """Batch-tile size: block == full batch for small B (always legal, no
    overhang); otherwise a multiple of 256 chosen so the tile count is even
    and >= 2 (v7x megacore balance), capped at max_tile_b."""
    max_tile_b = max(256, _round_up(max_tile_b, 256))
    if batch <= 256:
        return batch
    n_pairs = -(-batch // (2 * max_tile_b))             # ceil
    tile = _round_up(-(-batch // (2 * n_pairs)), 256)   # ceil(batch / (2*n_pairs))
    return min(tile, max_tile_b)


def centralized_critic_kernel(x_ref, w1_ref, b1_ref, w2_ref, b2_ref,
                              w3_ref, b3_ref, o_ref):
    """One batch tile of: relu(x@W1+b1) -> relu(.@W2+b2) -> .@w3 + b3 (width 1)."""
    # Layer 1: single merged K=d_in bf16 MXU pass, f32 accumulation.
    # Bias + ReLU + bf16 recast fused into one elementwise pass.
    h1 = jnp.maximum(
        jnp.dot(x_ref[...], w1_ref[...], preferred_element_type=jnp.float32)
        + b1_ref[...], 0.0).astype(jnp.bfloat16)                 # (tile_b, 256)

    # Layer 2: bf16 MXU matmul, f32 accumulation, fused bias + ReLU.
    h2 = jnp.maximum(
        jnp.dot(h1, w2_ref[...], preferred_element_type=jnp.float32)
        + b2_ref[...], 0.0)                                       # (tile_b, 128) f32

    # Layer 3 (output width 1): VPU broadcast-multiply + lane reduction keeps
    # the MXU free for the next pipelined tile's real matmuls.
    o_ref[...] = jnp.sum(h2 * w3_ref[...], axis=-1, keepdims=True) + b3_ref[...]


def centralized_critic(obs_cat, act_cat, params, *, max_tile_b=2048):
    """JAX wrapper: one fused concat+cast pass, then the whole MLP hot path in a
    single batch-tiled Pallas call."""
    w1, b1, w2, b2, w3, b3 = params
    batch, d_obs = obs_cat.shape
    d_act = act_cat.shape[-1]
    d_in = d_obs + d_act

    # Single fused pass producing the dominant input stream in bf16; lets
    # layer 1 be ONE K=d_in MXU pass on every TPU generation (v5e included).
    x = jnp.concatenate([obs_cat, act_cat], axis=-1).astype(jnp.bfloat16)

    # Tiny one-time weight casts / reshapes (weights are VMEM-resident).
    w1b = w1.astype(jnp.bfloat16)                   # (d_in, 256)
    w2b = w2.astype(jnp.bfloat16)                   # (256, 128)
    b1r = b1.reshape(1, -1).astype(jnp.float32)     # (1, 256)
    b2r = b2.reshape(1, -1).astype(jnp.float32)     # (1, 128)
    w3r = w3.reshape(1, -1).astype(jnp.float32)     # (1, 128)  row for VPU reduce
    b3r = b3.reshape(1, 1).astype(jnp.float32)      # (1, 1)

    tile_b = _choose_tile_b(batch, max_tile_b)
    grid = (pl.cdiv(batch, tile_b),)    # ragged last tile handled by block masking

    def resident(arr):
        # Constant index_map -> DMA'd into VMEM once, resident across the grid.
        return pl.BlockSpec(arr.shape, lambda i: (0, 0))

    out = pl.pallas_call(
        centralized_critic_kernel,
        out_shape=jax.ShapeDtypeStruct((batch, 1), jnp.float32),
        grid=grid,
        in_specs=[
            pl.BlockSpec((tile_b, d_in), lambda i: (i, 0)),   # activations, pipelined
            resident(w1b), resident(b1r),
            resident(w2b), resident(b2r),
            resident(w3r), resident(b3r),
        ],
        # (tile_b, 1) output is lane-sparse but tiny (4 B/row); kept simple per
        # review — only relayout to a lane-dense slab if the store tail ever
        # shows up in a trace.
        out_specs=pl.BlockSpec((tile_b, 1), lambda i: (i, 0)),
        compiler_params=pltpu.CompilerParams(
            dimension_semantics=("parallel",),   # v7x: shard batch tiles over 2 TCs
        ),
    )(x, w1b, b1r, w2b, b2r, w3r, b3r)

    return out


def init_params(key, total_obs, total_actions):
    """Deterministic synthetic parameters (PyTorch-Linear-like uniform init).
    Weights are (in_features, out_features); biases are (1, out_features)."""
    d_in = total_obs + total_actions
    dims = [(d_in, 256), (256, 128), (128, 1)]
    params = []
    for (fin, fout) in dims:
        key, kw, kb = jax.random.split(key, 3)
        bound = 1.0 / jnp.sqrt(jnp.float32(fin))
        w = jax.random.uniform(kw, (fin, fout), jnp.float32, -bound, bound)
        b = jax.random.uniform(kb, (1, fout), jnp.float32, -bound, bound)
        params += [w, b]
    return tuple(params)


if __name__ == "__main__":
    # Small, shape-consistent example: 8 agents' obs/actions concatenated.
    # In production, batch many environment steps so MXU cadence (not launch
    # latency) dominates.
    batch = 8
    total_obs = 24
    total_actions = 8

    key = jax.random.PRNGKey(0)
    k_obs, k_act, k_par = jax.random.split(key, 3)

    obs_cat = jax.random.normal(k_obs, (batch, total_obs), jnp.float32)
    act_cat = jax.random.normal(k_act, (batch, total_actions), jnp.float32)
    params = init_params(k_par, total_obs, total_actions)

    out = jax.jit(centralized_critic)(obs_cat, act_cat, params)
    out = jax.block_until_ready(out)
    assert out.shape == (batch, 1)

    w1, b1, w2, b2, w3, b3 = params

    # (a) Matched-precision reference (bf16 MXU inputs / f32 accumulation) — tight.
    xb = jnp.concatenate([obs_cat, act_cat], axis=-1).astype(jnp.bfloat16)
    h1m = jnp.maximum(
        jnp.dot(xb, w1.astype(jnp.bfloat16),
                preferred_element_type=jnp.float32) + b1, 0.0)
    h2m = jnp.maximum(
        jnp.dot(h1m.astype(jnp.bfloat16), w2.astype(jnp.bfloat16),
                preferred_element_type=jnp.float32) + b2, 0.0)
    ref_matched = h2m @ w3 + b3
    assert jnp.allclose(out, ref_matched, atol=2e-3, rtol=2e-3)

    # (b) Original full-f32 module semantics — loose (bf16 quantization noise).
    xf = jnp.concatenate([obs_cat, act_cat], axis=-1)
    ref = jnp.maximum(xf @ w1 + b1, 0.0)
    ref = jnp.maximum(ref @ w2 + b2, 0.0)
    ref = ref @ w3 + b3
    assert jnp.allclose(out, ref, atol=5e-2, rtol=5e-2)

    print("KERNEL_OK")
</pallas_src>

<mosaic_0001>
module attributes {stable_mosaic.version = 11 : i64} {
  func.func @centralized_critic_kernel(%arg0: i32, %arg1: memref<8x32xbf16, #tpu.memory_space<vmem>>, %arg2: memref<32x256xbf16, #tpu.memory_space<vmem>>, %arg3: memref<1x256xf32, #tpu.memory_space<vmem>>, %arg4: memref<256x128xbf16, #tpu.memory_space<vmem>>, %arg5: memref<1x128xf32, #tpu.memory_space<vmem>>, %arg6: memref<1x128xf32, #tpu.memory_space<vmem>>, %arg7: memref<1x1xf32, #tpu.memory_space<vmem>>, %arg8: memref<8x1xf32, #tpu.memory_space<vmem>>) attributes {dimension_semantics = [#tpu.dimension_semantics<parallel>], iteration_bounds = array<i64: 1>, scalar_prefetch = 0 : i64, scratch_operands = 0 : i64, tpu.core_type = #tpu.core_type<tc>, window_params = [{transform_indices = @transform_0, window_bounds = array<i64: 8, 32>}, {pipeline_mode = #tpu.pipeline_mode<synchronous>, transform_indices = @transform_1, window_bounds = array<i64: 32, 256>}, {pipeline_mode = #tpu.pipeline_mode<synchronous>, transform_indices = @transform_2, window_bounds = array<i64: 1, 256>}, {pipeline_mode = #tpu.pipeline_mode<synchronous>, transform_indices = @transform_3, window_bounds = array<i64: 256, 128>}, {pipeline_mode = #tpu.pipeline_mode<synchronous>, transform_indices = @transform_4, window_bounds = array<i64: 1, 128>}, {pipeline_mode = #tpu.pipeline_mode<synchronous>, transform_indices = @transform_5, window_bounds = array<i64: 1, 128>}, {pipeline_mode = #tpu.pipeline_mode<synchronous>, transform_indices = @transform_6, window_bounds = array<i64: 1, 1>}, {transform_indices = @transform_7, window_bounds = array<i64: 8, 1>}]} {
    %c0 = arith.constant 0 : index
    %c0_0 = arith.constant 0 : index
    %0 = vector.load %arg1[%c0, %c0_0] : memref<8x32xbf16, #tpu.memory_space<vmem>>, vector<8x32xbf16>
    %c0_1 = arith.constant 0 : index
    %c0_2 = arith.constant 0 : index
    %1 = vector.load %arg2[%c0_1, %c0_2] : memref<32x256xbf16, #tpu.memory_space<vmem>>, vector<32x256xbf16>
    %cst = arith.constant dense<0.000000e+00> : vector<8x256xf32>
    %2 = tpu.matmul %0, %1, %cst {dimension_numbers = #tpu.dot_dimension_numbers<[1], [0], [0], [1], [0, 0, 1, 1], [], []>} : vector<8x32xbf16>, vector<32x256xbf16>, vector<8x256xf32> -> vector<8x256xf32>
    %c0_3 = arith.constant 0 : index
    %c0_4 = arith.constant 0 : index
    %3 = vector.load %arg3[%c0_3, %c0_4] : memref<1x256xf32, #tpu.memory_space<vmem>>, vector<1x256xf32>
    %4 = vector.broadcast %3 : vector<1x256xf32> to vector<8x256xf32>
    %5 = arith.addf %2, %4 : vector<8x256xf32>
    %cst_5 = arith.constant 0.000000e+00 : f32
    %6 = vector.broadcast %cst_5 : f32 to vector<8x256xf32>
    %7 = arith.maximumf %5, %6 : vector<8x256xf32>
    %8 = arith.truncf %7 : vector<8x256xf32> to vector<8x256xbf16>
    %c0_6 = arith.constant 0 : index
    %c0_7 = arith.constant 0 : index
    %9 = vector.load %arg4[%c0_6, %c0_7] : memref<256x128xbf16, #tpu.memory_space<vmem>>, vector<256x128xbf16>
    %cst_8 = arith.constant dense<0.000000e+00> : vector<8x128xf32>
    %10 = tpu.matmul %8, %9, %cst_8 {dimension_numbers = #tpu.dot_dimension_numbers<[1], [0], [0], [1], [0, 0, 1, 1], [], []>} : vector<8x256xbf16>, vector<256x128xbf16>, vector<8x128xf32> -> vector<8x128xf32>
    %c0_9 = arith.constant 0 : index
    %c0_10 = arith.constant 0 : index
    %11 = vector.load %arg5[%c0_9, %c0_10] : memref<1x128xf32, #tpu.memory_space<vmem>>, vector<1x128xf32>
    %12 = vector.broadcast %11 : vector<1x128xf32> to vector<8x128xf32>
    %13 = arith.addf %10, %12 : vector<8x128xf32>
    %cst_11 = arith.constant 0.000000e+00 : f32
    %14 = vector.broadcast %cst_11 : f32 to vector<8x128xf32>
    %15 = arith.maximumf %13, %14 : vector<8x128xf32>
    %c0_12 = arith.constant 0 : index
    %c0_13 = arith.constant 0 : index
    %16 = vector.load %arg6[%c0_12, %c0_13] : memref<1x128xf32, #tpu.memory_space<vmem>>, vector<1x128xf32>
    %17 = vector.broadcast %16 : vector<1x128xf32> to vector<8x128xf32>
    %18 = arith.mulf %15, %17 : vector<8x128xf32>
    %cst_14 = arith.constant dense<0.000000e+00> : vector<8xf32>
    %19 = vector.multi_reduction <add>, %18, %cst_14 [1] : vector<8x128xf32> to vector<8xf32>
    %20 = vector.shape_cast %19 : vector<8xf32> to vector<8x1xf32>
    %c0_15 = arith.constant 0 : index
    %c0_16 = arith.constant 0 : index
    %21 = vector.load %arg7[%c0_15, %c0_16] : memref<1x1xf32, #tpu.memory_space<vmem>>, vector<1x1xf32>
    %22 = vector.broadcast %21 : vector<1x1xf32> to vector<8x1xf32>
    %23 = arith.addf %20, %22 : vector<8x1xf32>
    %c0_17 = arith.constant 0 : index
    %c0_18 = arith.constant 0 : index
    %24 = vector.load %arg8[%c0_17, %c0_18] : memref<8x1xf32, #tpu.memory_space<vmem>>, vector<8x1xf32>
    tpu.vector_store %arg8[%c0_17, %c0_18], %23 {strides = array<i32>} : memref<8x1xf32, #tpu.memory_space<vmem>>, vector<8x1xf32>,
    return
  }
  func.func @transform_0(%arg0: i32) -> (i32, i32) {
    %c0_i32 = arith.constant 0 : i32
    %c0_i32_0 = arith.constant 0 : i32
    return %arg0, %c0_i32 : i32, i32
  }
  func.func @transform_1(%arg0: i32) -> (i32, i32) {
    %c0_i32 = arith.constant 0 : i32
    %c0_i32_0 = arith.constant 0 : i32
    %c0_i32_1 = arith.constant 0 : i32
    return %c0_i32, %c0_i32_0 : i32, i32
  }
  func.func @transform_2(%arg0: i32) -> (i32, i32) {
    %c0_i32 = arith.constant 0 : i32
    %c0_i32_0 = arith.constant 0 : i32
    %c0_i32_1 = arith.constant 0 : i32
    return %c0_i32, %c0_i32_0 : i32, i32
  }
  func.func @transform_3(%arg0: i32) -> (i32, i32) {
    %c0_i32 = arith.constant 0 : i32
    %c0_i32_0 = arith.constant 0 : i32
    %c0_i32_1 = arith.constant 0 : i32
    return %c0_i32, %c0_i32_0 : i32, i32
  }
  func.func @transform_4(%arg0: i32) -> (i32, i32) {
    %c0_i32 = arith.constant 0 : i32
    %c0_i32_0 = arith.constant 0 : i32
    %c0_i32_1 = arith.constant 0 : i32
    return %c0_i32, %c0_i32_0 : i32, i32
  }
  func.func @transform_5(%arg0: i32) -> (i32, i32) {
    %c0_i32 = arith.constant 0 : i32
    %c0_i32_0 = arith.constant 0 : i32
    %c0_i32_1 = arith.constant 0 : i32
    return %c0_i32, %c0_i32_0 : i32, i32
  }
  func.func @transform_6(%arg0: i32) -> (i32, i32) {
    %c0_i32 = arith.constant 0 : i32
    %c0_i32_0 = arith.constant 0 : i32
    %c0_i32_1 = arith.constant 0 : i32
    return %c0_i32, %c0_i32_0 : i32, i32
  }
  func.func @transform_7(%arg0: i32) -> (i32, i32) {
    %c0_i32 = arith.constant 0 : i32
    %c0_i32_0 = arith.constant 0 : i32
    return %arg0, %c0_i32 : i32, i32
  }
}

</mosaic_0001>

<llo_original>
// kernel: centralized_critic.1
$region0: #{centralized_critic.1}
  #allocation0 [shape = 'u32[]', space=smem, size = 0x4, offset = 0x4, fixed_abs, tag = 'smem constant byte address 0x4 - core index']
  #allocation1 [shape = 'u32[72,128]{1,0:T(1,128)}', space=vmem, size = 0x9000, scoped, tag = 'internal scratch']
  #allocation2 [shape = 'f32[1,1]{1,0:T(1,128)S(1)}', space=vmem, size = 0x200, scoped, tag = 'scoped memory for centralized_critic.1']
  %s0 = inlined_call_operand.vmem [shape: bf16[8,32], index: 0, kind: input, shape index: {}]
  %s1 = inlined_call_operand.vmem [shape: bf16[32,256], index: 1, kind: input, shape index: {}]
  %s2 = inlined_call_operand.vmem [shape: f32[1,256], index: 2, kind: input, shape index: {}]
  %s3 = inlined_call_operand.vmem [shape: bf16[256,128], index: 3, kind: input, shape index: {}]
  %s4 = inlined_call_operand.vmem [shape: f32[1,128], index: 4, kind: input, shape index: {}]
  %s5 = inlined_call_operand.vmem [shape: f32[1,128], index: 5, kind: input, shape index: {}]
  %s6 = inlined_call_operand.<no memory space> [shape: f32[1,1], index: 6, kind: input, shape index: {}]
  %s7 = inlined_call_operand.vmem [shape: f32[8,1], index: 7, kind: output, shape index: {}]
  %s8 = sld [smem:[#allocation0]]
  $region38: #{centralized_critic.1} parent=0
    _
  %s10 = ssub.s32 1, %s8
  %s11 = scalar_select 0, %s10, %s8
  %v12 = vstv %s6
  %13 = vst [vmem:[#allocation2] sm:$0x1] %v12
  // Predicated region
  $region2: #{centralized_critic.1} parent=0 // pred_check
    _
  $region3: #{centralized_critic.1} parent=0 // pred_check_branch
    %15 = sbr.rel (0) target = $region5
  $region4: #{centralized_critic.1} parent=0 // pred_region
    _
  $region5: #{centralized_critic.1} parent=0 // pred_fallthru
    _
  // Predicated region
  $region6: #{centralized_critic.1} parent=0 // pred_check
    _
  $region7: #{centralized_critic.1} parent=0 // pred_check_branch
    %17 = sbr.rel (0) target = $region9
  $region8: #{centralized_critic.1} parent=0 // pred_region
    _
  $region9: #{centralized_critic.1} parent=0 // pred_fallthru
    _
  // Predicated region
  $region10: #{centralized_critic.1} parent=0 // pred_check
    _
  $region11: #{centralized_critic.1} parent=0 // pred_check_branch
    %19 = sbr.rel (0) target = $region13
  $region12: #{centralized_critic.1} parent=0 // pred_region
    _
  $region13: #{centralized_critic.1} parent=0 // pred_fallthru
    _
  // Predicated region
  $region14: #{centralized_critic.1} parent=0 // pred_check
    _
  $region15: #{centralized_critic.1} parent=0 // pred_check_branch
    %21 = sbr.rel (0) target = $region17
  $region16: #{centralized_critic.1} parent=0 // pred_region
    _
  $region17: #{centralized_critic.1} parent=0 // pred_fallthru
    _
  // Predicated region
  $region18: #{centralized_critic.1} parent=0 // pred_check
    _
  $region19: #{centralized_critic.1} parent=0 // pred_check_branch
    %23 = sbr.rel (0) target = $region21
  $region20: #{centralized_critic.1} parent=0 // pred_region
    _
  $region21: #{centralized_critic.1} parent=0 // pred_fallthru
    _
  // Predicated region
  $region22: #{centralized_critic.1} parent=0 // pred_check
    _
  $region23: #{centralized_critic.1} parent=0 // pred_check_branch
    %25 = sbr.rel (0) target = $region25
  $region24: #{centralized_critic.1} parent=0 // pred_region
    _
  $region25: #{centralized_critic.1} parent=0 // pred_fallthru
    _
  // Predicated region
  $region26: #{centralized_critic.1} parent=0 // pred_check
    _
  $region27: #{centralized_critic.1} parent=0 // pred_check_branch
    %27 = sbr.rel (0) target = $region29
  $region28: #{centralized_critic.1} parent=0 // pred_region
    _
  $region29: #{centralized_critic.1} parent=0 // pred_fallthru
    _
  %v29 = vld [vmem:[%s0] sm:$0xf]
  %v30 = vld [vmem:[%s1] sm:$0xff]
  %v31 = vld [vmem:[%s1 + $0x8] sm:$0xff]
  %v32 = vld [vmem:[%s1 + $0x10] sm:$0xff]
  %v33 = vld [vmem:[%s1 + $0x18] sm:$0xff]
  %v34 = vld [vmem:[%s2] sm:$0x3]
  %v36 = vperm.slane %v34, 0
  %v37 = vperm.slane %v34, 1
  %v44 = vunpack.c.l.b16 %v30
  %v45 = vunpack.c.h.b16 %v30
  %v46 = vunpack.c.l.b16 %v31
  %v47 = vunpack.c.h.b16 %v31
  %v48 = vunpack.c.l.b16 %v32
  %v49 = vunpack.c.h.b16 %v32
  %v50 = vunpack.c.l.b16 %v33
  %v51 = vunpack.c.h.b16 %v33
  %v52 = vpack.c.b16 %v46, %v44
  %v53 = vpack.c.b16 %v47, %v45
  %v54 = vpack.c.b16 %v50, %v48
  %v55 = vpack.c.b16 %v51, %v49
  %vm60 = vcmask 261120
  %v62 = vsel %vm60, %v29, 0
  %64 = vmatpush.bf16.msra.mxu0 0
  %65 = vmatpush.bf16.msra.mxu0 0
  %66 = vmatpush.bf16.msra.mxu0 0
  %67 = vmatpush.bf16.msra.mxu0 0
  %68 = vmatpush.bf16.msra.mxu0 0
  %69 = vmatpush.bf16.msra.mxu0 0
  %70 = vmatpush.bf16.msra.mxu0 %v54
  %71 = vmatpush.bf16.msra.mxu0 %v52
  %72 = vmatmul.bf16.gmra.mxu0 %v62
  %v73 = vpop.f32.mrf.mxu0
  %v74 = vadd.f32 %v36, %v73
  %v75 = vpop.f32.mrf.mxu0
  %76 = vdwg.mxu0
  %77 = vmatpush.bf16.msra.mxu0 0
  %78 = vmatpush.bf16.msra.mxu0 0
  %79 = vmatpush.bf16.msra.mxu0 0
  %80 = vmatpush.bf16.msra.mxu0 0
  %81 = vmatpush.bf16.msra.mxu0 0
  %82 = vmatpush.bf16.msra.mxu0 0
  %83 = vmatpush.bf16.msra.mxu0 %v55
  %84 = vmatpush.bf16.msra.mxu0 %v53
  %85 = vmatmul.bf16.gmra.mxu0 %v62
  %v86 = vpop.f32.mrf.mxu0
  %v87 = vadd.f32 %v37, %v86
  %v88 = vpop.f32.mrf.mxu0
  %89 = vdwg.mxu0
  %v90 = vmax.f32 %v74, 0.0
  %v91 = vmax.f32 %v87, 0.0
  %v92 = vpack.c.bf16 %v90, %v90
  %v93 = vpack.c.bf16 %v91, %v91
  %v94 = vld [vmem:[%s3] sm:$0xf]
  %v95 = vld [vmem:[%s3 + $0x4] sm:$0xf]
  %v96 = vld [vmem:[%s3 + $0x8] sm:$0xf]
  %v97 = vld [vmem:[%s3 + $0xc] sm:$0xf]
  %v98 = vld [vmem:[%s3 + $0x10] sm:$0xf]
  %v99 = vld [vmem:[%s3 + $0x14] sm:$0xf]
  %v100 = vld [vmem:[%s3 + $0x18] sm:$0xf]
  %v101 = vld [vmem:[%s3 + $0x1c] sm:$0xf]
  %v102 = vld [vmem:[%s3 + $0x20] sm:$0xf]
  %v103 = vld [vmem:[%s3 + $0x24] sm:$0xf]
  %v104 = vld [vmem:[%s3 + $0x28] sm:$0xf]
  %v105 = vld [vmem:[%s3 + $0x2c] sm:$0xf]
  %v106 = vld [vmem:[%s3 + $0x30] sm:$0xf]
  %v107 = vld [vmem:[%s3 + $0x34] sm:$0xf]
  %v108 = vld [vmem:[%s3 + $0x38] sm:$0xf]
  %v109 = vld [vmem:[%s3 + $0x3c] sm:$0xf]
  %v110 = vld [vmem:[%s3 + $0x40] sm:$0xf]
  %v111 = vld [vmem:[%s3 + $0x44] sm:$0xf]
  %v112 = vld [vmem:[%s3 + $0x48] sm:$0xf]
  %v113 = vld [vmem:[%s3 + $0x4c] sm:$0xf]
  %v114 = vld [vmem:[%s3 + $0x50] sm:$0xf]
  %v115 = vld [vmem:[%s3 + $0x54] sm:$0xf]
  %v116 = vld [vmem:[%s3 + $0x58] sm:$0xf]
  %v117 = vld [vmem:[%s3 + $0x5c] sm:$0xf]
  %v118 = vld [vmem:[%s3 + $0x60] sm:$0xf]
  %v119 = vld [vmem:[%s3 + $0x64] sm:$0xf]
  %v120 = vld [vmem:[%s3 + $0x68] sm:$0xf]
  %v121 = vld [vmem:[%s3 + $0x6c] sm:$0xf]
  %v122 = vld [vmem:[%s3 + $0x70] sm:$0xf]
  %v123 = vld [vmem:[%s3 + $0x74] sm:$0xf]
  %v124 = vld [vmem:[%s3 + $0x78] sm:$0xf]
  %v125 = vld [vmem:[%s3 + $0x7c] sm:$0xf]
  %v126 = vld [vmem:[%s4] sm:$0x1]
  %v128 = vperm.slane %v126, 0
  %v162 = vunpack.c.l.b16 %v94
  %v163 = vunpack.c.l.b16 %v95
  %v164 = vunpack.c.l.b16 %v96
  %v165 = vunpack.c.l.b16 %v97
  %v166 = vunpack.c.l.b16 %v98
  %v167 = vunpack.c.l.b16 %v99
  %v168 = vunpack.c.l.b16 %v100
  %v169 = vunpack.c.l.b16 %v101
  %v170 = vunpack.c.l.b16 %v102
  %v171 = vunpack.c.l.b16 %v103
  %v172 = vunpack.c.l.b16 %v104
  %v173 = vunpack.c.l.b16 %v105
  %v174 = vunpack.c.l.b16 %v106
  %v175 = vunpack.c.l.b16 %v107
  %v176 = vunpack.c.l.b16 %v108
  %v177 = vunpack.c.l.b16 %v109
  %v178 = vunpack.c.l.b16 %v110
  %v179 = vunpack.c.l.b16 %v111
  %v180 = vunpack.c.l.b16 %v112
  %v181 = vunpack.c.l.b16 %v113
  %v182 = vunpack.c.l.b16 %v114
  %v183 = vunpack.c.l.b16 %v115
  %v184 = vunpack.c.l.b16 %v116
  %v185 = vunpack.c.l.b16 %v117
  %v186 = vunpack.c.l.b16 %v118
  %v187 = vunpack.c.l.b16 %v119
  %v188 = vunpack.c.l.b16 %v120
  %v189 = vunpack.c.l.b16 %v121
  %v190 = vunpack.c.l.b16 %v122
  %v191 = vunpack.c.l.b16 %v123
  %v192 = vunpack.c.l.b16 %v124
  %v193 = vunpack.c.l.b16 %v125
  %v194 = vpack.c.b16 %v163, %v162
  %v195 = vpack.c.b16 %v165, %v164
  %v196 = vpack.c.b16 %v167, %v166
  %v197 = vpack.c.b16 %v169, %v168
  %v198 = vpack.c.b16 %v171, %v170
  %v199 = vpack.c.b16 %v173, %v172
  %v200 = vpack.c.b16 %v175, %v174
  %v201 = vpack.c.b16 %v177, %v176
  %v202 = vpack.c.b16 %v179, %v178
  %v203 = vpack.c.b16 %v181, %v180
  %v204 = vpack.c.b16 %v183, %v182
  %v205 = vpack.c.b16 %v185, %v184
  %v206 = vpack.c.b16 %v187, %v186
  %v207 = vpack.c.b16 %v189, %v188
  %v208 = vpack.c.b16 %v191, %v190
  %v209 = vpack.c.b16 %v193, %v192
  %226 = vmatpush.bf16.msra.mxu0 %v201
  %227 = vmatpush.bf16.msra.mxu0 %v200
  %228 = vmatpush.bf16.msra.mxu0 %v199
  %229 = vmatpush.bf16.msra.mxu0 %v198
  %230 = vmatpush.bf16.msra.mxu0 %v197
  %231 = vmatpush.bf16.msra.mxu0 %v196
  %232 = vmatpush.bf16.msra.mxu0 %v195
  %233 = vmatpush.bf16.msra.mxu0 %v194
  %234 = vmatmul.bf16.gmra.mxu0 %v92
  %v235 = vpop.f32.mrf.mxu0
  %v236 = vadd.f32 %v128, %v235
  %v237 = vpop.f32.mrf.mxu0
  %238 = vdwg.mxu0
  %239 = vmatpush.bf16.msra.mxu0 %v209
  %240 = vmatpush.bf16.msra.mxu0 %v208
  %241 = vmatpush.bf16.msra.mxu0 %v207
  %242 = vmatpush.bf16.msra.mxu0 %v206
  %243 = vmatpush.bf16.msra.mxu0 %v205
  %244 = vmatpush.bf16.msra.mxu0 %v204
  %245 = vmatpush.bf16.msra.mxu0 %v203
  %246 = vmatpush.bf16.msra.mxu0 %v202
  %247 = vmatmul.bf16.gmra.mxu0 %v93
  %v248 = vpop.f32.mrf.mxu0
  %v249 = vadd.f32 %v236, %v248
  %v250 = vpop.f32.mrf.mxu0
  %251 = vdwg.mxu0
  %v252 = vmax.f32 %v249, 0.0
  %v253 = vld [vmem:[%s5] sm:$0x1]
  %v255 = vperm.slane %v253, 0
  %v257 = vmul.f32 %v252, %v255
  %258 = vadd.xlane.f32.xlu0 %v257
  %v259 = vpop.xlane.xlu0 %258
  %v260 = vld [vmem:[#allocation2] sm:$0x1]
  %v262 = vperm.slane %v260, 0
  %v264 = vadd.f32 %v259, %v262
  %vm265 = vcmask 7168
  %266 = vst.msk [vmem:[%s7] sm:$0xff] %vm265, %v264
  // Predicated region
  $region30: #{centralized_critic.1} parent=0 // pred_check
    _
  $region31: #{centralized_critic.1} parent=0 // pred_check_branch
    %268 = sbr.rel (0) target = $region33
  $region32: #{centralized_critic.1} parent=0 // pred_region
    _
  $region33: #{centralized_critic.1} parent=0 // pred_fallthru
    _
  // Predicated region
  $region34: #{centralized_critic.1} parent=0 // pred_check
    _
  $region35: #{centralized_critic.1} parent=0 // pred_check_branch
    %270 = sbr.rel (0) target = $region37
  $region36: #{centralized_critic.1} parent=0 // pred_region
    _
  $region37: #{centralized_critic.1} parent=0 // pred_fallthru
    _

</llo_original>
